<compile_context>
chip_gen: v5e
topology: v5e:2x2
jax: 0.10.0
libtpu: 0.0.40
codegen_flags: <defaults>
</compile_context>

<pallas_src>
import functools

import jax
import jax.numpy as jnp
from jax import lax
from jax.experimental import pallas as pl
from jax.experimental.pallas import tpu as pltpu


def _conv3x3_flat_kernel(x_ref, w_ref, m_ref, o_ref, *, hw, shifts):
    """3x3 conv for one batch image as a single MXU matmul.

    x_ref: (1, Cpad, HW)   flattened NCHW image (channels zero-padded to mult. of 8)
    w_ref: (Cout, 9*Cpad)  weight matrix, column order (tap, channel)
    m_ref: (9, HW)         0/1 border-validity masks, one row per tap
    o_ref: (1, Cout, HW)   conv output, lane-dense (HW is a multiple of 128 here)
    """
    x = x_ref[0]                                        # (Cpad, HW)

    parts = []
    for t, s in enumerate(shifts):                      # 9 taps, static unroll
        if s == 0:
            parts.append(x)                             # center tap: mask is all ones
        else:
            # z[:, f] = x[:, (f + s) mod HW]; wrapped/out-of-image entries are
            # zeroed by the precomputed mask row.
            z = pltpu.roll(x, shift=(-s) % hw, axis=1)
            parts.append(z * m_ref[t:t + 1, :])

    col = jnp.concatenate(parts, axis=0)                # (9*Cpad, HW) im2col operand
    acc = jnp.dot(w_ref[...], col,                      # (Cout, HW), f32 accumulate
                  preferred_element_type=jnp.float32)
    o_ref[0] = acc.astype(o_ref.dtype)


def pixel_unshuffle_nchw(y, r):
    # (N, C, H, W) -> (N, C*r*r, H//r, W//r), PyTorch PixelUnshuffle semantics.
    N, C, H, W = y.shape
    y = y.reshape(N, C, H // r, r, W // r, r)
    y = jnp.transpose(y, (0, 1, 3, 5, 2, 4))            # (N, C, i, j, H//r, W//r)
    return y.reshape(N, C * r * r, H // r, W // r)


def downsample_forward(x_nchw, weight_oihw):
    """Downsample.forward: Conv2d(n_feat, n_feat//2, 3, pad=1, bias=False) + PixelUnshuffle(2)."""
    N, C, H, W = x_nchw.shape
    Cout = weight_oihw.shape[0]
    assert weight_oihw.shape == (Cout, C, 3, 3)
    assert H % 2 == 0 and W % 2 == 0
    HW = H * W

    # Pad channels up to a multiple of 8 so every im2col part is an integral
    # number of sublane tiles (no-op for realistic n_feat >= 8).
    Cpad = -(-C // 8) * 8
    if Cpad != C:
        x_nchw = jnp.pad(x_nchw, ((0, 0), (0, Cpad - C), (0, 0), (0, 0)))

    # NCHW -> (N, Cpad, H*W): contiguous, free reshape (no transpose).
    x_flat = x_nchw.reshape(N, Cpad, HW)

    # Weight (Cout, C, 3, 3) -> (Cout, 9*Cpad), column order (ky, kx, c).
    w_t = jnp.transpose(weight_oihw, (0, 2, 3, 1))      # (Cout, 3, 3, C)
    if Cpad != C:
        w_t = jnp.pad(w_t, ((0, 0), (0, 0), (0, 0), (0, Cpad - C)))
    w_mat = w_t.reshape(Cout, 9 * Cpad)

    # Per-tap flat shifts and border masks (halo handled in-kernel; no spatial
    # jnp.pad / extra HBM pass over the activations).
    f = jnp.arange(HW, dtype=jnp.int32)
    h_idx, w_idx = f // W, f % W
    shifts, masks = [], []
    for ky in range(3):
        for kx in range(3):
            sy, sx = ky - 1, kx - 1
            shifts.append(sy * W + sx)
            valid = ((h_idx + sy >= 0) & (h_idx + sy < H) &
                     (w_idx + sx >= 0) & (w_idx + sx < W))
            masks.append(valid)
    mask_arr = jnp.stack(masks, axis=0).astype(x_flat.dtype)    # (9, HW)

    kernel = functools.partial(_conv3x3_flat_kernel, hw=HW, shifts=tuple(shifts))

    # TODO(synk): for production-sized images add a row-strip grid axis with a
    # one-row halo so each block stays well inside v7x's 64 MiB VMEM; at these
    # sizes one image per grid step fits on all generations.
    conv_flat = pl.pallas_call(
        kernel,
        out_shape=jax.ShapeDtypeStruct((N, Cout, HW), x_nchw.dtype),
        grid=(N,),
        in_specs=[
            pl.BlockSpec((1, Cpad, HW), lambda b: (b, 0, 0)),
            # Constant index maps: weight and masks are DMA'd once and stay
            # resident (Pallas skips the re-fetch when the block index repeats).
            pl.BlockSpec((Cout, 9 * Cpad), lambda b: (0, 0)),
            pl.BlockSpec((9, HW), lambda b: (0, 0)),
        ],
        out_specs=pl.BlockSpec((1, Cout, HW), lambda b: (b, 0, 0)),
        compiler_params=pltpu.CompilerParams(
            dimension_semantics=("parallel",),   # batch images across v7x's 2 TCs
        ),
    )(x_flat, w_mat, mask_arr)

    # Free reshape back to the NCHW conv output, then PixelUnshuffle(2) as a
    # single XLA layout pass over the smallest tensor in the pipeline.
    # TODO(synk): the unshuffle could be fused into the kernel store via a
    # strided lane deinterleave of the (Cout, H*W) accumulator.
    y = conv_flat.reshape(N, Cout, H, W)
    return pixel_unshuffle_nchw(y, 2)


if __name__ == "__main__":
    key = jax.random.PRNGKey(0)
    kx_key, kw_key = jax.random.split(key)

    n_feat = 4
    N, H, W = 2, 16, 16
    x = jax.random.normal(kx_key, (N, n_feat, H, W), dtype=jnp.float32)
    # Conv2d(n_feat, n_feat//2, 3, 3) weight, PyTorch OIHW layout, deterministic init.
    weight = jax.random.normal(
        kw_key, (n_feat // 2, n_feat, 3, 3), dtype=jnp.float32) * 0.1

    out = downsample_forward(x, weight)
    out = jax.block_until_ready(out)

    # Reference: XLA conv + an independently formulated pixel-unshuffle.
    ref_conv = lax.conv_general_dilated(
        x, weight, window_strides=(1, 1), padding=((1, 1), (1, 1)),
        dimension_numbers=("NCHW", "OIHW", "NCHW"))
    ref_parts = [ref_conv[:, :, i::2, j::2] for i in range(2) for j in range(2)]
    ref = jnp.stack(ref_parts, axis=2).reshape(N, 2 * n_feat, H // 2, W // 2)

    assert out.shape == (N, 2 * n_feat, H // 2, W // 2), out.shape
    assert jnp.allclose(out, ref, atol=1e-4, rtol=1e-4)
    print("KERNEL_OK")
</pallas_src>

<mosaic_0001>
module attributes {stable_mosaic.version = 11 : i64} {
  func.func @_conv3x3_flat_kernel(%arg0: i32, %arg1: memref<1x8x256xf32, #tpu.memory_space<vmem>>, %arg2: memref<2x72xf32, #tpu.memory_space<vmem>>, %arg3: memref<9x256xf32, #tpu.memory_space<vmem>>, %arg4: memref<1x2x256xf32, #tpu.memory_space<vmem>>) attributes {dimension_semantics = [#tpu.dimension_semantics<parallel>], iteration_bounds = array<i64: 2>, scalar_prefetch = 0 : i64, scratch_operands = 0 : i64, tpu.core_type = #tpu.core_type<tc>, window_params = [{transform_indices = @transform_0, window_bounds = array<i64: 1, 8, 256>}, {pipeline_mode = #tpu.pipeline_mode<synchronous>, transform_indices = @transform_1, window_bounds = array<i64: 2, 72>}, {pipeline_mode = #tpu.pipeline_mode<synchronous>, transform_indices = @transform_2, window_bounds = array<i64: 9, 256>}, {transform_indices = @transform_3, window_bounds = array<i64: 1, 2, 256>}]} {
    %c0 = arith.constant 0 : index
    %c0_0 = arith.constant 0 : index
    %c0_1 = arith.constant 0 : index
    %0 = vector.load %arg1[%c0, %c0_0, %c0_1] : memref<1x8x256xf32, #tpu.memory_space<vmem>>, vector<1x8x256xf32>
    %1 = vector.shape_cast %0 : vector<1x8x256xf32> to vector<8x256xf32>
    %c17_i32 = arith.constant 17 : i32
    %2 = tpu.dynamic_rotate %1 by %c17_i32 dim 1 : vector<8x256xf32>, i32 -> vector<8x256xf32>
    %c0_2 = arith.constant 0 : index
    %c0_3 = arith.constant 0 : index
    %3 = vector.load %arg3[%c0_2, %c0_3] : memref<9x256xf32, #tpu.memory_space<vmem>>, vector<1x256xf32>
    %4 = vector.broadcast %3 : vector<1x256xf32> to vector<8x256xf32>
    %5 = arith.mulf %2, %4 : vector<8x256xf32>
    %c16_i32 = arith.constant 16 : i32
    %6 = tpu.dynamic_rotate %1 by %c16_i32 dim 1 : vector<8x256xf32>, i32 -> vector<8x256xf32>
    %c1 = arith.constant 1 : index
    %c0_4 = arith.constant 0 : index
    %7 = vector.load %arg3[%c1, %c0_4] : memref<9x256xf32, #tpu.memory_space<vmem>>, vector<1x256xf32>
    %8 = vector.broadcast %7 : vector<1x256xf32> to vector<8x256xf32>
    %9 = arith.mulf %6, %8 : vector<8x256xf32>
    %c15_i32 = arith.constant 15 : i32
    %10 = tpu.dynamic_rotate %1 by %c15_i32 dim 1 : vector<8x256xf32>, i32 -> vector<8x256xf32>
    %c2 = arith.constant 2 : index
    %c0_5 = arith.constant 0 : index
    %11 = vector.load %arg3[%c2, %c0_5] : memref<9x256xf32, #tpu.memory_space<vmem>>, vector<1x256xf32>
    %12 = vector.broadcast %11 : vector<1x256xf32> to vector<8x256xf32>
    %13 = arith.mulf %10, %12 : vector<8x256xf32>
    %c1_i32 = arith.constant 1 : i32
    %14 = tpu.dynamic_rotate %1 by %c1_i32 dim 1 : vector<8x256xf32>, i32 -> vector<8x256xf32>
    %c3 = arith.constant 3 : index
    %c0_6 = arith.constant 0 : index
    %15 = vector.load %arg3[%c3, %c0_6] : memref<9x256xf32, #tpu.memory_space<vmem>>, vector<1x256xf32>
    %16 = vector.broadcast %15 : vector<1x256xf32> to vector<8x256xf32>
    %17 = arith.mulf %14, %16 : vector<8x256xf32>
    %c255_i32 = arith.constant 255 : i32
    %18 = tpu.dynamic_rotate %1 by %c255_i32 dim 1 : vector<8x256xf32>, i32 -> vector<8x256xf32>
    %c5 = arith.constant 5 : index
    %c0_7 = arith.constant 0 : index
    %19 = vector.load %arg3[%c5, %c0_7] : memref<9x256xf32, #tpu.memory_space<vmem>>, vector<1x256xf32>
    %20 = vector.broadcast %19 : vector<1x256xf32> to vector<8x256xf32>
    %21 = arith.mulf %18, %20 : vector<8x256xf32>
    %c241_i32 = arith.constant 241 : i32
    %22 = tpu.dynamic_rotate %1 by %c241_i32 dim 1 : vector<8x256xf32>, i32 -> vector<8x256xf32>
    %c6 = arith.constant 6 : index
    %c0_8 = arith.constant 0 : index
    %23 = vector.load %arg3[%c6, %c0_8] : memref<9x256xf32, #tpu.memory_space<vmem>>, vector<1x256xf32>
    %24 = vector.broadcast %23 : vector<1x256xf32> to vector<8x256xf32>
    %25 = arith.mulf %22, %24 : vector<8x256xf32>
    %c240_i32 = arith.constant 240 : i32
    %26 = tpu.dynamic_rotate %1 by %c240_i32 dim 1 : vector<8x256xf32>, i32 -> vector<8x256xf32>
    %c7 = arith.constant 7 : index
    %c0_9 = arith.constant 0 : index
    %27 = vector.load %arg3[%c7, %c0_9] : memref<9x256xf32, #tpu.memory_space<vmem>>, vector<1x256xf32>
    %28 = vector.broadcast %27 : vector<1x256xf32> to vector<8x256xf32>
    %29 = arith.mulf %26, %28 : vector<8x256xf32>
    %c239_i32 = arith.constant 239 : i32
    %30 = tpu.dynamic_rotate %1 by %c239_i32 dim 1 : vector<8x256xf32>, i32 -> vector<8x256xf32>
    %c8 = arith.constant 8 : index
    %c0_10 = arith.constant 0 : index
    %31 = vector.load %arg3[%c8, %c0_10] : memref<9x256xf32, #tpu.memory_space<vmem>>, vector<1x256xf32>
    %32 = vector.broadcast %31 : vector<1x256xf32> to vector<8x256xf32>
    %33 = arith.mulf %30, %32 : vector<8x256xf32>
    %34 = tpu.concatenate %5, %9, %13, %17, %1, %21, %25, %29, %33 in 0 : vector<8x256xf32>, vector<8x256xf32>, vector<8x256xf32>, vector<8x256xf32>, vector<8x256xf32>, vector<8x256xf32>, vector<8x256xf32>, vector<8x256xf32>, vector<8x256xf32> -> vector<72x256xf32>
    %c0_11 = arith.constant 0 : index
    %c0_12 = arith.constant 0 : index
    %35 = vector.load %arg2[%c0_11, %c0_12] : memref<2x72xf32, #tpu.memory_space<vmem>>, vector<2x72xf32>
    %cst = arith.constant dense<0.000000e+00> : vector<2x256xf32>
    %36 = tpu.matmul %35, %34, %cst {dimension_numbers = #tpu.dot_dimension_numbers<[1], [0], [0], [1], [0, 0, 1, 1], [], []>} : vector<2x72xf32>, vector<72x256xf32>, vector<2x256xf32> -> vector<2x256xf32>
    %c0_13 = arith.constant 0 : index
    %c0_14 = arith.constant 0 : index
    %c0_15 = arith.constant 0 : index
    %37 = vector.load %arg4[%c0_13, %c0_14, %c0_15] : memref<1x2x256xf32, #tpu.memory_space<vmem>>, vector<1x2x256xf32>
    %38 = vector.shape_cast %37 : vector<1x2x256xf32> to vector<2x256xf32>
    %39 = vector.shape_cast %36 : vector<2x256xf32> to vector<1x2x256xf32>
    tpu.vector_store %arg4[%c0_13, %c0_14, %c0_15], %39 {strides = array<i32>} : memref<1x2x256xf32, #tpu.memory_space<vmem>>, vector<1x2x256xf32>,
    return
  }
  func.func @transform_0(%arg0: i32) -> (i32, i32, i32) {
    %c0_i32 = arith.constant 0 : i32
    %c0_i32_0 = arith.constant 0 : i32
    %c0_i32_1 = arith.constant 0 : i32
    return %arg0, %c0_i32, %c0_i32_0 : i32, i32, i32
  }
  func.func @transform_1(%arg0: i32) -> (i32, i32) {
    %c0_i32 = arith.constant 0 : i32
    %c0_i32_0 = arith.constant 0 : i32
    %c0_i32_1 = arith.constant 0 : i32
    return %c0_i32, %c0_i32_0 : i32, i32
  }
  func.func @transform_2(%arg0: i32) -> (i32, i32) {
    %c0_i32 = arith.constant 0 : i32
    %c0_i32_0 = arith.constant 0 : i32
    %c0_i32_1 = arith.constant 0 : i32
    return %c0_i32, %c0_i32_0 : i32, i32
  }
  func.func @transform_3(%arg0: i32) -> (i32, i32, i32) {
    %c0_i32 = arith.constant 0 : i32
    %c0_i32_0 = arith.constant 0 : i32
    %c0_i32_1 = arith.constant 0 : i32
    return %arg0, %c0_i32, %c0_i32_0 : i32, i32, i32
  }
}

</mosaic_0001>

<llo_original>
// kernel: tpu_custom_call.1
$region0: #{tpu_custom_call.1}
  #allocation0 [shape = 'u32[]', space=smem, size = 0x4, offset = 0x4, fixed_abs, tag = 'smem constant byte address 0x4 - core index']
  #allocation1 [shape = 'u32[72,128]{1,0:T(1,128)}', space=vmem, size = 0x9000, scoped, tag = 'internal scratch']
  %s0 = inlined_call_operand.hbm [shape: f32[2,8,256], index: 0, kind: input, shape index: {}]
  %s1 = inlined_call_operand.hbm [shape: f32[2,72], index: 1, kind: input, shape index: {}]
  %s2 = inlined_call_operand.hbm [shape: f32[9,256], index: 2, kind: input, shape index: {}]
  %s3 = inlined_call_operand.hbm [shape: f32[2,2,256], index: 3, kind: output, shape index: {}]
  %s4 = sld [smem:[#allocation0]]
  $region57: #{tpu_custom_call.1} parent=0
    _
  %s6 = ssub.s32 1, %s4
  %s7 = scalar_select 0, %s6, %s4
  $region1: #{tpu_custom_call.1} parent=0
    #allocation2 [shape = 'u8[16384]{0}', space=vmem, size = 0x4000, scoped, tag = 'input window, operand 0']
    #allocation3 [shape = 's32[2]{0}', space=sflag, size = 0x8, scoped, tag = 'scoped memory for tpu_custom_call.1']
    #allocation4 [shape = 's32[2]{0}', space=sflag, size = 0x8, scoped, tag = 'scoped memory for tpu_custom_call.1']
    #allocation5 [shape = 'u8[1024]{0}', space=vmem, size = 0x400, scoped, tag = 'input window, operand 1, single buffered']
    #allocation6 [shape = 's32[1]{0}', space=sflag, size = 0x4, scoped, tag = 'scoped memory for tpu_custom_call.1']
    #allocation7 [shape = 'u8[16384]{0}', space=vmem, size = 0x4000, scoped, tag = 'input window, operand 2, single buffered']
    #allocation8 [shape = 'u8[4096]{0}', space=vmem, size = 0x1000, scoped, tag = 'output window, operand 0']
    %8 = vsyncpa [#allocation3], 0
    %s9 = scalar_lea.sflag [#allocation3], 1
    %10 = vsyncpa %s9, 0
    %11 = vsyncpa [#allocation6], 0
    %12 = vsyncpa [#allocation4], 0
    %s13 = scalar_lea.sflag [#allocation4], 1
    %14 = vsyncpa %s13, 0
    loop: start=0, step=1, limit=4
    $region2: #{tpu_custom_call.1} parent=1 // loop_pre_header
      _
    $region3: #{tpu_custom_call.1} parent=1 // loop_header
      %s16 = sphi 0, %s20
      %p17 = scmp.ge.s32.totalorder %s16, 4
      %s26 = sphi 0, %s28
      %s29 = sphi 0, %s26
      %s30 = sphi 0, %s29
      %s46 = sphi 0, %s30
      %s50 = sphi 0, %s50
      %s52 = sphi 0, %s50
      %s53 = sphi 0, %s52
      %s67 = sphi 0, %s53
      %s71 = sphi 0, %s71
      %s73 = sphi 0, %s71
      %s74 = sphi 0, %s73
      %s88 = sphi 0, %s74
      %s94 = sphi 0, %s96
      %s97 = sphi 0, %s94
      %s98 = sphi 0, %s97
      %s114 = sphi 0, %s98
    $region4: #{tpu_custom_call.1} parent=1 // loop_header_branch
      %19 = sbr.rel (%p17) target = $region8
    $region5: #{tpu_custom_call.1} parent=1 // loop_body
      %s21 = ssub.s32 %s16, 1
      %s22 = ssub.s32 %s16, 2
      %s23 = sadd.s32 %s16, 1
      %s24 = ssub.s32 %s16, %s23
      %p25 = scmp.eq.s32.totalorder %s24, 0
      %s27 = sadd.s32 %s26, 1
      %s28 = scalar_select %p25, %s26, %s27
      %p31 = pneg %p25
      %p32 = scmp.eq.s32.totalorder %s16, 1
      %p33 = por %p31, %p32
      %p34 = scmp.ne.s32.totalorder %s26, %s29
      %p35 = scmp.eq.s32.totalorder %s16, 0
      %p36 = por %p34, %p35
      %p37 = scmp.ne.s32.totalorder %s26, %s29
      %p38 = scmp.eq.s32.totalorder %s21, 1
      %p39 = por %p37, %p38
      %p40 = scmp.ne.s32.totalorder %s29, %s30
      %p41 = scmp.eq.s32.totalorder %s21, 0
      %p42 = por %p40, %p41
      %p43 = scmp.ne.s32.totalorder %s29, %s30
      %p44 = scmp.eq.s32.totalorder %s22, 1
      %p45 = por %p43, %p44
      %p47 = scmp.ne.s32.totalorder %s30, %s46
      %p48 = scmp.eq.s32.totalorder %s22, 0
      %p49 = por %p47, %p48
      %s51 = sadd.s32 %s50, 1
      %p54 = scmp.eq.s32.totalorder %s16, 1
      %p55 = scmp.ne.s32.totalorder %s50, %s52
      %p56 = scmp.eq.s32.totalorder %s16, 0
      %p57 = por %p55, %p56
      %p58 = scmp.ne.s32.totalorder %s50, %s52
      %p59 = scmp.eq.s32.totalorder %s21, 1
      %p60 = por %p58, %p59
      %p61 = scmp.ne.s32.totalorder %s52, %s53
      %p62 = scmp.eq.s32.totalorder %s21, 0
      %p63 = por %p61, %p62
      %p64 = scmp.ne.s32.totalorder %s52, %s53
      %p65 = scmp.eq.s32.totalorder %s22, 1
      %p66 = por %p64, %p65
      %p68 = scmp.ne.s32.totalorder %s53, %s67
      %p69 = scmp.eq.s32.totalorder %s22, 0
      %p70 = por %p68, %p69
      %s72 = sadd.s32 %s71, 1
      %p75 = scmp.eq.s32.totalorder %s16, 1
      %p76 = scmp.ne.s32.totalorder %s71, %s73
      %p77 = scmp.eq.s32.totalorder %s16, 0
      %p78 = por %p76, %p77
      %p79 = scmp.ne.s32.totalorder %s71, %s73
      %p80 = scmp.eq.s32.totalorder %s21, 1
      %p81 = por %p79, %p80
      %p82 = scmp.ne.s32.totalorder %s73, %s74
      %p83 = scmp.eq.s32.totalorder %s21, 0
      %p84 = por %p82, %p83
      %p85 = scmp.ne.s32.totalorder %s73, %s74
      %p86 = scmp.eq.s32.totalorder %s22, 1
      %p87 = por %p85, %p86
      %p89 = scmp.ne.s32.totalorder %s74, %s88
      %p90 = scmp.eq.s32.totalorder %s22, 0
      %p91 = por %p89, %p90
      %s92 = ssub.s32 %s16, %s23
      %p93 = scmp.eq.s32.totalorder %s92, 0
      %s95 = sadd.s32 %s94, 1
      %s96 = scalar_select %p93, %s94, %s95
      %p99 = pneg %p93
      %p100 = scmp.eq.s32.totalorder %s16, 1
      %p101 = por %p99, %p100
      %p102 = scmp.ne.s32.totalorder %s94, %s97
      %p103 = scmp.eq.s32.totalorder %s16, 0
      %p104 = por %p102, %p103
      %p105 = scmp.ne.s32.totalorder %s94, %s97
      %p106 = scmp.eq.s32.totalorder %s21, 1
      %p107 = por %p105, %p106
      %p108 = scmp.ne.s32.totalorder %s97, %s98
      %p109 = scmp.eq.s32.totalorder %s21, 0
      %p110 = por %p108, %p109
      %p111 = scmp.ne.s32.totalorder %s97, %s98
      %p112 = scmp.eq.s32.totalorder %s22, 1
      %p113 = por %p111, %p112
      %p115 = scmp.ne.s32.totalorder %s98, %s114
      %p116 = scmp.eq.s32.totalorder %s22, 0
      %p117 = por %p115, %p116
      %p118 = scmp.le.s32.totalorder 1, %s16
      %p119 = scmp.lt.s32.totalorder %s16, 3
      %p120 = pnand %p118, %p119
      %p121 = pneg %p120
      // Predicated region
      $region9: #{tpu_custom_call.1} parent=5 // pred_check
        _
      $region10: #{tpu_custom_call.1} parent=5 // pred_check_branch
        %123 = sbr.rel (%p120) target = $region12
      $region11: #{tpu_custom_call.1} parent=5 // pred_region
        %s124 = ssub.s32 %s16, 1
        // Predicated region
        $region13: #{tpu_custom_call.1} parent=11 // pred_check
          %p125 = pneg %p63
        $region14: #{tpu_custom_call.1} parent=11 // pred_check_branch
          %127 = sbr.rel (%p125) target = $region16
        $region15: #{tpu_custom_call.1} parent=11 // pred_region
          %129 = vsyncadd [#allocation6], 0
          %s131 = sshll.u32 %s1, 4
          %s132 = int_to_ptr.hbm [resolvable:$true] %s131
          %s133 = sshll.u32 [#allocation5], 4
          %s134 = int_to_ptr.vmem [resolvable:$true] %s133
          %136 = dma.hbm_to_vmem [thread:$0]  %s132, 32, %s134, [#allocation6]
        $region16: #{tpu_custom_call.1} parent=11 // pred_fallthru
          _
        // Predicated region
        $region17: #{tpu_custom_call.1} parent=11 // pred_check
          %p137 = pneg %p84
        $region18: #{tpu_custom_call.1} parent=11 // pred_check_branch
          %139 = sbr.rel (%p137) target = $region20
        $region19: #{tpu_custom_call.1} parent=11 // pred_region
          %141 = vsyncadd [#allocation6], 0
          %s142 = sshll.u32 %s2, 4
          %s143 = int_to_ptr.hbm [resolvable:$true] %s142
          %s144 = sshll.u32 [#allocation7], 4
          %s145 = int_to_ptr.vmem [resolvable:$true] %s144
          %150 = dma.hbm_to_vmem [thread:$0]  %s143, 512, %s145, [#allocation6], 256, 256, 16
        $region20: #{tpu_custom_call.1} parent=11 // pred_fallthru
          _
      $region12: #{tpu_custom_call.1} parent=5 // pred_fallthru
        _
      %p151 = scmp.lt.s32.totalorder %s16, 2
      // Predicated region
      $region21: #{tpu_custom_call.1} parent=5 // pred_check
        %p152 = pneg %p151
      $region22: #{tpu_custom_call.1} parent=5 // pred_check_branch
        %154 = sbr.rel (%p152) target = $region24
      $region23: #{tpu_custom_call.1} parent=5 // pred_region
        // Predicated region
        $region25: #{tpu_custom_call.1} parent=23 // pred_check
          %p155 = pneg %p36
        $region26: #{tpu_custom_call.1} parent=23 // pred_check_branch
          %157 = sbr.rel (%p155) target = $region28
        $region27: #{tpu_custom_call.1} parent=23 // pred_region
          %s158 = sand.u32 %s26, 1
          %s159 = scalar_lea.sflag [#allocation3], %s158
          %s160 = sand.u32 %s26, 1
          %s161 = smul.addr %s160, 16
          %s162 = scalar_lea.vmem [#allocation2], %s161
          %164 = vsyncadd %s159, 0
          %s165 = smul.addr %s16, 2
          %s166 = smul.addr %s165, 8
          %s167 = scalar_lea.hbm %s0, %s166
          %s169 = sshll.u32 %s167, 4
          %s170 = int_to_ptr.hbm [resolvable:$true] %s169
          %s171 = sshll.u32 %s162, 4
          %s172 = int_to_ptr.vmem [resolvable:$true] %s171
          %174 = dma.hbm_to_vmem [thread:$0]  %s170, 256, %s172, %s159
        $region28: #{tpu_custom_call.1} parent=23 // pred_fallthru
          _
      $region24: #{tpu_custom_call.1} parent=5 // pred_fallthru
        _
      %p175 = scmp.le.s32.totalorder 1, %s16
      %p176 = scmp.lt.s32.totalorder %s16, 3
      %p177 = pnand %p175, %p176
      %p178 = pneg %p177
      // Predicated region
      $region29: #{tpu_custom_call.1} parent=5 // pred_check
        _
      $region30: #{tpu_custom_call.1} parent=5 // pred_check_branch
        %180 = sbr.rel (%p177) target = $region32
      $region31: #{tpu_custom_call.1} parent=5 // pred_region
        %s181 = ssub.s32 %s16, 1
        %s182 = sand.u32 %s29, 1
        %s183 = scalar_lea.sflag [#allocation3], %s182
        %s184 = sand.u32 %s29, 1
        %s185 = smul.addr %s184, 16
        %s186 = scalar_lea.vmem [#allocation2], %s185
        // Predicated region
        $region33: #{tpu_custom_call.1} parent=31 // pred_check
          %p187 = pneg %p42
        $region34: #{tpu_custom_call.1} parent=31 // pred_check_branch
          %189 = sbr.rel (%p187) target = $region36
        $region35: #{tpu_custom_call.1} parent=31 // pred_region
          %191 = dma.done %s183, 256
        $region36: #{tpu_custom_call.1} parent=31 // pred_fallthru
          _
        // Predicated region
        $region37: #{tpu_custom_call.1} parent=31 // pred_check
          %p192 = pneg %p63
        $region38: #{tpu_custom_call.1} parent=31 // pred_check_branch
          %194 = sbr.rel (%p192) target = $region40
        $region39: #{tpu_custom_call.1} parent=31 // pred_region
          %196 = dma.done [#allocation6], 32
        $region40: #{tpu_custom_call.1} parent=31 // pred_fallthru
          _
        // Predicated region
        $region41: #{tpu_custom_call.1} parent=31 // pred_check
          %p197 = pneg %p84
        $region42: #{tpu_custom_call.1} parent=31 // pred_check_branch
          %199 = sbr.rel (%p197) target = $region44
        $region43: #{tpu_custom_call.1} parent=31 // pred_region
          %201 = dma.done [#allocation6], 512
        $region44: #{tpu_custom_call.1} parent=31 // pred_fallthru
          _
        %s202 = sand.u32 %s29, 1
        %s203 = scalar_lea.sflag [#allocation3], %s202
        %s204 = sand.u32 %s29, 1
        %s205 = smul.addr %s204, 16
        %s206 = scalar_lea.vmem [#allocation2], %s205
        %p207 = pneg %p42
        %p208 = pneg %p39
        %p209 = pneg %p63
        %p210 = pneg %p60
        %p211 = pneg %p84
        %p212 = pneg %p81
        %p213 = pneg %p110
        %p214 = pneg %p107
        %s215 = sand.u32 %s97, 1
        %s216 = scalar_lea.sflag [#allocation4], %s215
        %s217 = sand.u32 %s97, 1
        %s218 = smul.addr %s217, 4
        %s219 = scalar_lea.vmem [#allocation8], %s218
        %v220 = vld [vmem:[%s186] sm:$0xff]
        %v221 = vld [vmem:[%s186 + $0x8] sm:$0xff]
        %222 = vrot.lane.b32.xlu0 %v220, 17
        %v223 = vpop.permute.xlu0 %222
        %224 = vrot.lane.b32.xlu0 %v221, 17
        %v225 = vpop.permute.xlu0 %224
        %v226 = vlaneseq
        %v227 = vand.u32 %v226, 127
        %vm228 = vcmp.lt.s32.totalorder %v227, 17
        %v229 = vsel %vm228, %v223, %v225
        %v230 = vsel %vm228, %v225, %v223
        %v231 = vld [vmem:[#allocation7] ss:$8 sm:$0x3]
        %v233 = vperm.slane %v231, 0
        %v234 = vperm.slane %v231, 1
        %v237 = vmul.f32 %v230, %v233
        %v238 = vmul.f32 %v229, %v234
        %239 = vrot.lane.b32.xlu0 %v220, 16
        %v240 = vpop.permute.xlu0 %239
        %241 = vrot.lane.b32.xlu0 %v221, 16
        %v242 = vpop.permute.xlu0 %241
        %vm243 = vcmp.lt.s32.totalorder %v227, 16
        %v244 = vsel %vm243, %v240, %v242
        %v245 = vsel %vm243, %v242, %v240
        %s246 = scalar_lea.vmem [#allocation7], 1
        %v247 = vld [vmem:[%s246] ss:$8 sm:$0x3]
        %v249 = vperm.slane %v247, 0
        %v250 = vperm.slane %v247, 1
        %v253 = vmul.f32 %v245, %v249
        %v254 = vmul.f32 %v244, %v250
        %255 = vrot.lane.b32.xlu0 %v220, 15
        %v256 = vpop.permute.xlu0 %255
        %257 = vrot.lane.b32.xlu0 %v221, 15
        %v258 = vpop.permute.xlu0 %257
        %vm259 = vcmp.lt.s32.totalorder %v227, 15
        %v260 = vsel %vm259, %v256, %v258
        %v261 = vsel %vm259, %v258, %v256
        %s262 = scalar_lea.vmem [#allocation7], 2
        %v263 = vld [vmem:[%s262] ss:$8 sm:$0x3]
        %v265 = vperm.slane %v263, 0
        %v266 = vperm.slane %v263, 1
        %v269 = vmul.f32 %v261, %v265
        %v270 = vmul.f32 %v260, %v266
        %271 = vrot.lane.b32.xlu0 %v220, 1
        %v272 = vpop.permute.xlu0 %271
        %273 = vrot.lane.b32.xlu0 %v221, 1
        %v274 = vpop.permute.xlu0 %273
        %vm275 = vcmp.lt.s32.totalorder %v227, 1
        %v276 = vsel %vm275, %v272, %v274
        %v277 = vsel %vm275, %v274, %v272
        %s278 = scalar_lea.vmem [#allocation7], 3
        %v279 = vld [vmem:[%s278] ss:$8 sm:$0x3]
        %v281 = vperm.slane %v279, 0
        %v282 = vperm.slane %v279, 1
        %v285 = vmul.f32 %v277, %v281
        %v286 = vmul.f32 %v276, %v282
        %287 = vrot.lane.b32.xlu0 %v220, 127
        %v288 = vpop.permute.xlu0 %287
        %289 = vrot.lane.b32.xlu0 %v221, 127
        %v290 = vpop.permute.xlu0 %289
        %vm291 = vcmp.lt.s32.totalorder %v227, 127
        %v292 = vsel %vm291, %v288, %v290
        %v293 = vsel %vm291, %v290, %v288
        %s294 = scalar_lea.vmem [#allocation7], 5
        %v295 = vld [vmem:[%s294] ss:$8 sm:$0x3]
        %v297 = vperm.slane %v295, 0
        %v298 = vperm.slane %v295, 1
        %v301 = vmul.f32 %v292, %v297
        %v302 = vmul.f32 %v293, %v298
        %303 = vrot.lane.b32.xlu0 %v220, 113
        %v304 = vpop.permute.xlu0 %303
        %305 = vrot.lane.b32.xlu0 %v221, 113
        %v306 = vpop.permute.xlu0 %305
        %vm307 = vcmp.lt.s32.totalorder %v227, 113
        %v308 = vsel %vm307, %v304, %v306
        %v309 = vsel %vm307, %v306, %v304
        %s310 = scalar_lea.vmem [#allocation7], 6
        %v311 = vld [vmem:[%s310] ss:$8 sm:$0x3]
        %v313 = vperm.slane %v311, 0
        %v314 = vperm.slane %v311, 1
        %v317 = vmul.f32 %v308, %v313
        %v318 = vmul.f32 %v309, %v314
        %319 = vrot.lane.b32.xlu0 %v220, 112
        %v320 = vpop.permute.xlu0 %319
        %321 = vrot.lane.b32.xlu0 %v221, 112
        %v322 = vpop.permute.xlu0 %321
        %vm323 = vcmp.lt.s32.totalorder %v227, 112
        %v324 = vsel %vm323, %v320, %v322
        %v325 = vsel %vm323, %v322, %v320
        %s326 = scalar_lea.vmem [#allocation7], 7
        %v327 = vld [vmem:[%s326] ss:$8 sm:$0x3]
        %v329 = vperm.slane %v327, 0
        %v330 = vperm.slane %v327, 1
        %v333 = vmul.f32 %v324, %v329
        %v334 = vmul.f32 %v325, %v330
        %335 = vrot.lane.b32.xlu0 %v220, 111
        %v336 = vpop.permute.xlu0 %335
        %337 = vrot.lane.b32.xlu0 %v221, 111
        %v338 = vpop.permute.xlu0 %337
        %vm339 = vcmp.lt.s32.totalorder %v227, 111
        %v340 = vsel %vm339, %v336, %v338
        %v341 = vsel %vm339, %v338, %v336
        %s342 = scalar_lea.vmem [#allocation7], 16
        %v343 = vld [vmem:[%s342] ss:$8 sm:$0x3]
        %v345 = vperm.slane %v343, 0
        %v346 = vperm.slane %v343, 1
        %v349 = vmul.f32 %v340, %v345
        %v350 = vmul.f32 %v341, %v346
        %v351 = vld [vmem:[#allocation5] sm:$0x3]
        %vm352 = vcmask 588800
        %v354 = vsel %vm352, %v351, 0
        %356 = vmatpush.msra.mxu0 0.0
        %357 = vmatpush.msra.mxu0 0.0
        %358 = vmatpush.msra.mxu0 0.0
        %359 = vmatpush.msra.mxu0 0.0
        %360 = vmatpush.msra.mxu0 0.0
        %361 = vmatpush.msra.mxu0 0.0
        %362 = vmatpush.msra.mxu0 0.0
        %363 = vmatpush.msra.mxu0 %v349
        %364 = vmatpush.msra.mxu0 %v333
        %365 = vmatpush.msra.mxu0 %v317
        %366 = vmatpush.msra.mxu0 %v301
        %367 = vmatpush.msra.mxu0 %v220
        %368 = vmatpush.msra.mxu0 %v285
        %369 = vmatpush.msra.mxu0 %v269
        %370 = vmatpush.msra.mxu0 %v253
        %371 = vmatpush.msra.mxu0 %v237
        %372 = vmatmul.f32.gmra.mxu0 %v354
        %v373 = vpop.f32.mrf.mxu0
        %v374 = vadd.f32 0.0, %v373
        %375 = vdwg.mxu0
        %376 = vmatpush.msra.mxu0 0.0
        %377 = vmatpush.msra.mxu0 0.0
        %378 = vmatpush.msra.mxu0 0.0
        %379 = vmatpush.msra.mxu0 0.0
        %380 = vmatpush.msra.mxu0 0.0
        %381 = vmatpush.msra.mxu0 0.0
        %382 = vmatpush.msra.mxu0 0.0
        %383 = vmatpush.msra.mxu0 %v350
        %384 = vmatpush.msra.mxu0 %v334
        %385 = vmatpush.msra.mxu0 %v318
        %386 = vmatpush.msra.mxu0 %v302
        %387 = vmatpush.msra.mxu0 %v221
        %388 = vmatpush.msra.mxu0 %v286
        %389 = vmatpush.msra.mxu0 %v270
        %390 = vmatpush.msra.mxu0 %v254
        %391 = vmatpush.msra.mxu0 %v238
        %392 = vmatmul.f32.gmra.mxu0 %v354
        %v393 = vpop.f32.mrf.mxu0
        %v394 = vadd.f32 0.0, %v393
        %395 = vdwg.mxu0
        %v398 = vrot.slane %v394, 6
        %vm399 = vcmask 1041408
        %v400 = vsel %vm399, %v374, %v398
        %402 = vst [vmem:[%s219] sm:$0xf] %v400
        %s403 = sand.u32 %s97, 1
        %s404 = scalar_lea.sflag [#allocation4], %s403
        %s405 = sand.u32 %s97, 1
        %s406 = smul.addr %s405, 4
        %s407 = scalar_lea.vmem [#allocation8], %s406
        // Predicated region
        $region45: #{tpu_custom_call.1} parent=31 // pred_check
          %p408 = pneg %p107
        $region46: #{tpu_custom_call.1} parent=31 // pred_check_branch
          %410 = sbr.rel (%p408) target = $region48
        $region47: #{tpu_custom_call.1} parent=31 // pred_region
          %412 = vsyncadd %s404, 0
          %s413 = smul.addr %s21, 2
          %s414 = smul.addr %s413, 2
          %s415 = scalar_lea.hbm %s3, %s414
          %s417 = sshll.u32 %s407, 4
          %s418 = int_to_ptr.vmem [resolvable:$true] %s417
          %s419 = sshll.u32 %s415, 4
          %s420 = int_to_ptr.hbm [resolvable:$true] %s419
          %422 = dma.vmem_to_hbm [thread:$0]  %s418, 64, %s420, %s404
        $region48: #{tpu_custom_call.1} parent=31 // pred_fallthru
          _
      $region32: #{tpu_custom_call.1} parent=5 // pred_fallthru
        _
      %p423 = scmp.le.s32.totalorder 2, %s16
      // Predicated region
      $region49: #{tpu_custom_call.1} parent=5 // pred_check
        %p424 = pneg %p423
      $region50: #{tpu_custom_call.1} parent=5 // pred_check_branch
        %426 = sbr.rel (%p424) target = $region52
      $region51: #{tpu_custom_call.1} parent=5 // pred_region
        %s427 = ssub.s32 %s16, 2
        // Predicated region
        $region53: #{tpu_custom_call.1} parent=51 // pred_check
          %p428 = pneg %p113
        $region54: #{tpu_custom_call.1} parent=51 // pred_check_branch
          %430 = sbr.rel (%p428) target = $region56
        $region55: #{tpu_custom_call.1} parent=51 // pred_region
          %s431 = sand.u32 %s98, 1
          %s432 = scalar_lea.sflag [#allocation4], %s431
          %s433 = sand.u32 %s98, 1
          %s434 = smul.addr %s433, 4
          %s435 = scalar_lea.vmem [#allocation8], %s434
          %437 = dma.done %s432, 64
        $region56: #{tpu_custom_call.1} parent=51 // pred_fallthru
          _
      $region52: #{tpu_custom_call.1} parent=5 // pred_fallthru
        _
    $region6: #{tpu_custom_call.1} parent=1 // loop_footer
      %s20 = sadd.s32 1, %s16
    $region7: #{tpu_custom_call.1} parent=1 // loop_footer_branch
      %15 = sbr.rel target = $region3
    $region8: #{tpu_custom_call.1} parent=1 // loop_exit
      _
    %438 = vsyncpa [#allocation3], 1
    %s439 = scalar_lea.sflag [#allocation3], 1
    %440 = vsyncpa %s439, 1
    %441 = vsyncpa [#allocation6], 1
    %442 = vsyncpa [#allocation4], 1
    %s443 = scalar_lea.sflag [#allocation4], 1
    %444 = vsyncpa %s443, 1

</llo_original>
